<compile_context>
chip_gen: v7x
topology: tpu7x:2x2x1
jax: 0.10.0
libtpu: 0.0.40
codegen_flags: <defaults>
</compile_context>

<pallas_src>
import math

import jax
import jax.numpy as jnp
import numpy as np
from jax.experimental import pallas as pl
from jax.experimental.pallas import tpu as pltpu


def _block_perm_matrix(logit, bs):
    """Dense bs x bs matrix equivalent of one BlockPerm factor (real case)."""
    p = jax.nn.sigmoid(logit.astype(jnp.float32))  # (3,) probabilities
    idx = jnp.arange(bs)
    # even/odd separation blend: E = (1 - p0) * I + p0 * P_even_odd
    eo_perm = jnp.concatenate([jnp.arange(0, bs, 2), jnp.arange(1, bs, 2)])
    E = ((1.0 - p[0]) * jnp.eye(bs, dtype=jnp.float32)).at[idx, eo_perm].add(p[0])
    # reverse-each-half blend
    half = bs // 2
    rev_perm = jnp.concatenate([half - 1 - jnp.arange(half),
                                bs - 1 - jnp.arange(half)])
    diag_w = jnp.concatenate([jnp.full((half,), 1.0 - p[1], jnp.float32),
                              jnp.full((half,), 1.0 - p[2], jnp.float32)])
    off_w = jnp.concatenate([jnp.full((half,), p[1], jnp.float32),
                             jnp.full((half,), p[2], jnp.float32)])
    R = jnp.zeros((bs, bs), jnp.float32).at[idx, idx].add(diag_w)
    R = R.at[idx, rev_perm].add(off_w)
    return R @ E  # apply even/odd first, then reverse (matches BlockPerm.forward)


def _perm_product_kernel(x_ref, mt_ref, o_ref):
    # Single MXU matmul: out = x_tile @ M_total^T  (weights pre-composed & pre-transposed).
    o_ref[...] = jnp.dot(x_ref[...], mt_ref[...],
                         preferred_element_type=jnp.float32)


def block_perm_product_forward(x, logits, *, row_tile=256, min_width=128):
    """JAX/Pallas equivalent of BlockPermProduct(size).forward for real input.

    logits: list of per-factor (3,) arrays, ordered like self.factors
            (increasing block size, share_logit=False).
    """
    # TODO(synk): complex=True path ((..., size, 2) inputs) not implemented; real path only.
    size = x.shape[-1]
    m = int(math.log2(size))
    assert size == 1 << m, "size must be a power of 2"
    sizes = [size >> i for i in range(m - 1)[::-1]]  # [4, 8, ..., size]
    assert len(logits) == len(sizes)

    # ---- compose the full factor chain into one (size, size) matrix (plain JAX) ----
    # Factors are applied in reversed order (largest block first), so
    #   M_total = A_4 @ A_8 @ ... @ A_size,   out_row = row @ M_total^T
    M = jnp.eye(size, dtype=jnp.float32)
    for lg, bs in zip(logits[::-1], sizes[::-1]):          # application order
        B = _block_perm_matrix(lg, bs)                     # (bs, bs)
        A = jnp.kron(jnp.eye(size // bs, dtype=jnp.float32), B)  # block-diagonal
        M = A @ M
    MT = M.T                                               # right-multiply form

    # ---- lane packing: keep the matmul/output lane dimension >= 128 ----
    width = max(size, min_width)
    lane_pack = width // size
    if lane_pack > 1:
        MT = jnp.kron(jnp.eye(lane_pack, dtype=jnp.float32), MT)  # (width, width)
    MT = MT.astype(jnp.float32)

    lead = x.shape[:-1]
    rows = int(np.prod(lead)) if lead else 1
    packed_rows = -(-rows // lane_pack)                    # ceil(rows / lane_pack)
    eff_tile = min(row_tile, -(-packed_rows // 8) * 8)     # multiple of 8, <= row_tile
    packed_padded = -(-packed_rows // eff_tile) * eff_tile
    total_rows = packed_padded * lane_pack

    xf = x.reshape(rows, size).astype(jnp.float32)
    if total_rows != rows:
        xf = jnp.pad(xf, ((0, total_rows - rows), (0, 0)))  # map is row-wise linear
    xp = xf.reshape(packed_padded, width)

    grid = (pl.cdiv(packed_padded, eff_tile),)
    cost = pl.CostEstimate(
        flops=2 * packed_padded * width * width,
        transcendentals=0,
        bytes_accessed=(2 * packed_padded * width + width * width) * 4,
    )

    out = pl.pallas_call(
        _perm_product_kernel,
        out_shape=jax.ShapeDtypeStruct((packed_padded, width), jnp.float32),
        grid_spec=pltpu.PrefetchScalarGridSpec(
            num_scalar_prefetch=0,
            grid=grid,
            in_specs=[
                pl.BlockSpec((eff_tile, width), lambda i: (i, 0)),
                pl.BlockSpec((width, width), lambda i: (0, 0)),  # resident weights
            ],
            out_specs=pl.BlockSpec((eff_tile, width), lambda i: (i, 0)),
        ),
        compiler_params=pltpu.CompilerParams(
            dimension_semantics=("parallel",),
            vmem_limit_bytes=64 * 1024 * 1024),
        cost_estimate=cost,
    )(xp, MT)

    out = out.reshape(packed_padded * lane_pack, size)[:rows]
    return out.reshape(x.shape).astype(x.dtype)


def _ref_forward(x, logits):
    """Pure-JAX reference mirroring the PyTorch sequential blends exactly."""
    size = x.shape[-1]
    m = int(math.log2(size))
    sizes = [size >> i for i in range(m - 1)[::-1]]
    out = x.astype(jnp.float32)
    for lg, bs in zip(logits[::-1], sizes[::-1]):
        p = jax.nn.sigmoid(lg.astype(jnp.float32))
        shp = out.shape
        y = out.reshape(-1, bs)
        # permutation_factor_even_odd_mult
        sep = jnp.concatenate([y[:, 0::2], y[:, 1::2]], axis=-1)
        y = p[0] * sep + (1.0 - p[0]) * y
        # permutation_factor_reverse_mult
        half = bs // 2
        fh, sh = y[:, :half], y[:, half:]
        y = jnp.concatenate([(1.0 - p[1]) * fh + p[1] * fh[:, ::-1],
                             (1.0 - p[2]) * sh + p[2] * sh[:, ::-1]], axis=-1)
        out = y.reshape(shp)
    return out


if __name__ == "__main__":
    key = jax.random.PRNGKey(0)
    size = 32
    m = int(math.log2(size))
    n_factors = m - 1  # BlockPermProduct builds log2(size)-1 BlockPerm factors

    k_x, k_l, k_x2 = jax.random.split(key, 3)
    x = jax.random.normal(k_x, (2, 4, size), dtype=jnp.float32)
    # one (3,) logit per BlockPerm factor (share_logit=False), like torch.randn(3)
    logits = list(jax.random.normal(k_l, (n_factors, 3), dtype=jnp.float32))

    out = block_perm_product_forward(x, logits)
    out = jax.block_until_ready(out)
    ref = _ref_forward(x, logits)
    assert out.shape == x.shape and out.dtype == x.dtype
    np.testing.assert_allclose(np.asarray(out), np.asarray(ref), rtol=1e-5, atol=1e-5)

    # second check: row count not a multiple of the lane-pack factor (exercises padding)
    x2 = jax.random.normal(k_x2, (7, 5, size), dtype=jnp.float32)
    out2 = jax.block_until_ready(block_perm_product_forward(x2, logits))
    ref2 = _ref_forward(x2, logits)
    np.testing.assert_allclose(np.asarray(out2), np.asarray(ref2), rtol=1e-5, atol=1e-5)

    print("KERNEL_OK")
</pallas_src>

<mosaic_0001>
module attributes {stable_mosaic.version = 11 : i64} {
  func.func @_perm_product_kernel(%arg0: i32, %arg1: memref<8x128xf32, #tpu.memory_space<vmem>>, %arg2: memref<128x128xf32, #tpu.memory_space<vmem>>, %arg3: memref<8x128xf32, #tpu.memory_space<vmem>>) attributes {dimension_semantics = [#tpu.dimension_semantics<parallel>], iteration_bounds = array<i64: 1>, scalar_prefetch = 0 : i64, scratch_operands = 0 : i64, tpu.core_type = #tpu.core_type<tc>, window_params = [{transform_indices = @transform_0, window_bounds = array<i64: 8, 128>}, {pipeline_mode = #tpu.pipeline_mode<synchronous>, transform_indices = @transform_1, window_bounds = array<i64: 128, 128>}, {transform_indices = @transform_2, window_bounds = array<i64: 8, 128>}]} {
    %c0 = arith.constant 0 : index
    %c0_0 = arith.constant 0 : index
    %0 = vector.load %arg1[%c0, %c0_0] : memref<8x128xf32, #tpu.memory_space<vmem>>, vector<8x128xf32>
    %c0_1 = arith.constant 0 : index
    %c0_2 = arith.constant 0 : index
    %1 = vector.load %arg2[%c0_1, %c0_2] : memref<128x128xf32, #tpu.memory_space<vmem>>, vector<128x128xf32>
    %cst = arith.constant dense<0.000000e+00> : vector<8x128xf32>
    %2 = tpu.matmul %0, %1, %cst {dimension_numbers = #tpu.dot_dimension_numbers<[1], [0], [0], [1], [0, 0, 1, 1], [], []>} : vector<8x128xf32>, vector<128x128xf32>, vector<8x128xf32> -> vector<8x128xf32>
    %c0_3 = arith.constant 0 : index
    %c0_4 = arith.constant 0 : index
    %3 = vector.load %arg3[%c0_3, %c0_4] : memref<8x128xf32, #tpu.memory_space<vmem>>, vector<8x128xf32>
    tpu.vector_store %arg3[%c0_3, %c0_4], %2 {strides = array<i32>} : memref<8x128xf32, #tpu.memory_space<vmem>>, vector<8x128xf32>,
    return
  }
  func.func @transform_0(%arg0: i32) -> (i32, i32) {
    %c0_i32 = arith.constant 0 : i32
    %c0_i32_0 = arith.constant 0 : i32
    return %arg0, %c0_i32 : i32, i32
  }
  func.func @transform_1(%arg0: i32) -> (i32, i32) {
    %c0_i32 = arith.constant 0 : i32
    %c0_i32_0 = arith.constant 0 : i32
    %c0_i32_1 = arith.constant 0 : i32
    return %c0_i32, %c0_i32_0 : i32, i32
  }
  func.func @transform_2(%arg0: i32) -> (i32, i32) {
    %c0_i32 = arith.constant 0 : i32
    %c0_i32_0 = arith.constant 0 : i32
    return %arg0, %c0_i32 : i32, i32
  }
}

</mosaic_0001>

<llo_original>
// kernel: tpu_custom_call.1
$region0: #{tpu_custom_call.1}
  #allocation0 [shape = 'u32[]', space=smem, size = 0x4, offset = 0x4, fixed_abs, tag = 'smem constant byte address 0x4 - core index']
  #allocation1 [shape = 'u32[144,128]{1,0:T(1,128)}', space=vmem, size = 0x12000, scoped, tag = 'internal scratch']
  %s0 = inlined_call_operand.hbm [shape: f32[8,128], index: 0, kind: input, shape index: {}]
  %s1 = inlined_call_operand.hbm [shape: f32[128,128], index: 1, kind: input, shape index: {}]
  %s2 = inlined_call_operand.hbm [shape: f32[8,128], index: 2, kind: output, shape index: {}]
  %s3 = sld [smem:[#allocation0]]
  $region26: #{tpu_custom_call.1} parent=0
    _
  %s5 = ssub.s32 1, %s3
  %s6 = scalar_select 0, %s5, %s3
  $region1: #{tpu_custom_call.1} parent=0
    #allocation2 [shape = 'u8[4096]{0}', space=vmem, size = 0x1000, scoped, tag = 'input window, operand 0, single buffered']
    #allocation3 [shape = 's32[1]{0}', space=sflag, size = 0x4, scoped, tag = 'scoped memory for tpu_custom_call.1']
    #allocation4 [shape = 's32[1]{0}', space=sflag, size = 0x4, scoped, tag = 'scoped memory for tpu_custom_call.1']
    #allocation5 [shape = 'u8[65536]{0}', space=vmem, size = 0x10000, scoped, tag = 'input window, operand 1, single buffered']
    #allocation6 [shape = 's32[1]{0}', space=sflag, size = 0x4, scoped, tag = 'scoped memory for tpu_custom_call.1']
    #allocation7 [shape = 'u8[4096]{0}', space=vmem, size = 0x1000, scoped, tag = 'output window, operand 0, single buffered']
    %7 = vsyncpa [#allocation3], 0
    %8 = vsyncpa [#allocation6], 0
    %9 = vsyncpa [#allocation4], 0
    // Predicated region
    $region2: #{tpu_custom_call.1} parent=1 // pred_check
      _
    $region3: #{tpu_custom_call.1} parent=1 // pred_check_branch
      %11 = sbr.rel (0) target = $region5
    $region4: #{tpu_custom_call.1} parent=1 // pred_region
      %s13 = ssub.s32 128, 128
      %14 = vsyncadd [#allocation3], %s13
      %s16 = sshll.u32 [#allocation2], 4
      %s17 = int_to_ptr.vmem [resolvable:$true] %s16
      %19 = dma.hbm_to_vmem [thread:$0]  %s0, 128, %s17, [#allocation3]
    $region5: #{tpu_custom_call.1} parent=1 // pred_fallthru
      _
    // Predicated region
    $region6: #{tpu_custom_call.1} parent=1 // pred_check
      _
    $region7: #{tpu_custom_call.1} parent=1 // pred_check_branch
      %21 = sbr.rel (0) target = $region9
    $region8: #{tpu_custom_call.1} parent=1 // pred_region
      %s23 = ssub.s32 2048, 2048
      %24 = vsyncadd [#allocation6], %s23
      %s25 = sshll.u32 [#allocation5], 4
      %s26 = int_to_ptr.vmem [resolvable:$true] %s25
      %31 = dma.hbm_to_vmem [thread:$0]  %s1, 2048, %s26, [#allocation6], 128, 128, 8
    $region9: #{tpu_custom_call.1} parent=1 // pred_fallthru
      _
    // Predicated region
    $region10: #{tpu_custom_call.1} parent=1 // pred_check
      _
    $region11: #{tpu_custom_call.1} parent=1 // pred_check_branch
      %33 = sbr.rel (0) target = $region13
    $region12: #{tpu_custom_call.1} parent=1 // pred_region
      %34 = dma.done [#allocation3], 128
    $region13: #{tpu_custom_call.1} parent=1 // pred_fallthru
      _
    // Predicated region
    $region14: #{tpu_custom_call.1} parent=1 // pred_check
      _
    $region15: #{tpu_custom_call.1} parent=1 // pred_check_branch
      %36 = sbr.rel (0) target = $region17
    $region16: #{tpu_custom_call.1} parent=1 // pred_region
      %37 = dma.done [#allocation6], 2048
    $region17: #{tpu_custom_call.1} parent=1 // pred_fallthru
      _
    %v38 = vld [vmem:[#allocation2] sm:$0xff]
    %v39 = vld [vmem:[#allocation5] sm:$0xff]
    %v40 = vld [vmem:[#allocation5 + $0x8] sm:$0xff]
    %v41 = vld [vmem:[#allocation5 + $0x10] sm:$0xff]
    %v42 = vld [vmem:[#allocation5 + $0x18] sm:$0xff]
    %v43 = vld [vmem:[#allocation5 + $0x20] sm:$0xff]
    %v44 = vld [vmem:[#allocation5 + $0x28] sm:$0xff]
    %v45 = vld [vmem:[#allocation5 + $0x30] sm:$0xff]
    %v46 = vld [vmem:[#allocation5 + $0x38] sm:$0xff]
    %v47 = vld [vmem:[#allocation5 + $0x40] sm:$0xff]
    %v48 = vld [vmem:[#allocation5 + $0x48] sm:$0xff]
    %v49 = vld [vmem:[#allocation5 + $0x50] sm:$0xff]
    %v50 = vld [vmem:[#allocation5 + $0x58] sm:$0xff]
    %v51 = vld [vmem:[#allocation5 + $0x60] sm:$0xff]
    %v52 = vld [vmem:[#allocation5 + $0x68] sm:$0xff]
    %v53 = vld [vmem:[#allocation5 + $0x70] sm:$0xff]
    %v54 = vld [vmem:[#allocation5 + $0x78] sm:$0xff]
    %55 = vmatprep.subr.mxu0 0.0
    %56 = vmatpush1.msra.mxu0 %v39
    %57 = vmatprep.subr.mxu0 0.0
    %58 = vmatpush1.msra.mxu0 %v40
    %59 = vmatprep.subr.mxu0 0.0
    %60 = vmatpush1.msra.mxu0 %v41
    %61 = vmatprep.subr.mxu0 0.0
    %62 = vmatpush1.msra.mxu0 %v42
    %63 = vmatprep.subr.mxu0 0.0
    %64 = vmatpush1.msra.mxu0 %v43
    %65 = vmatprep.subr.mxu0 0.0
    %66 = vmatpush1.msra.mxu0 %v44
    %67 = vmatprep.subr.mxu0 0.0
    %68 = vmatpush1.msra.mxu0 %v45
    %69 = vmatprep.subr.mxu0 0.0
    %70 = vmatpush1.msra.mxu0 %v46
    %71 = vmatprep.subr.mxu0 0.0
    %72 = vmatpush1.msra.mxu0 %v47
    %73 = vmatprep.subr.mxu0 0.0
    %74 = vmatpush1.msra.mxu0 %v48
    %75 = vmatprep.subr.mxu0 0.0
    %76 = vmatpush1.msra.mxu0 %v49
    %77 = vmatprep.subr.mxu0 0.0
    %78 = vmatpush1.msra.mxu0 %v50
    %79 = vmatprep.subr.mxu0 0.0
    %80 = vmatpush1.msra.mxu0 %v51
    %81 = vmatprep.subr.mxu0 0.0
    %82 = vmatpush1.msra.mxu0 %v52
    %83 = vmatprep.subr.mxu0 0.0
    %84 = vmatpush1.msra.mxu0 %v53
    %85 = vmatprep.subr.mxu0 0.0
    %86 = vmatpush1.msra.mxu0 %v54
    %87 = vmatprep.subr.mxu0 0.0
    %88 = vmatpush1.msra.mxu0 0.0
    %89 = vmatprep.subr.mxu0 0.0
    %90 = vmatpush1.msra.mxu0 0.0
    %91 = vmatprep.subr.mxu0 0.0
    %92 = vmatpush1.msra.mxu0 0.0
    %93 = vmatprep.subr.mxu0 0.0
    %94 = vmatpush1.msra.mxu0 0.0
    %95 = vmatprep.subr.mxu0 0.0
    %96 = vmatpush1.msra.mxu0 0.0
    %97 = vmatprep.subr.mxu0 0.0
    %98 = vmatpush1.msra.mxu0 0.0
    %99 = vmatprep.subr.mxu0 0.0
    %100 = vmatpush1.msra.mxu0 0.0
    %101 = vmatprep.subr.mxu0 0.0
    %102 = vmatpush1.msra.mxu0 0.0
    %103 = vmatprep.subr.mxu0 0.0
    %104 = vmatpush1.msra.mxu0 0.0
    %105 = vmatprep.subr.mxu0 0.0
    %106 = vmatpush1.msra.mxu0 0.0
    %107 = vmatprep.subr.mxu0 0.0
    %108 = vmatpush1.msra.mxu0 0.0
    %109 = vmatprep.subr.mxu0 0.0
    %110 = vmatpush1.msra.mxu0 0.0
    %111 = vmatprep.subr.mxu0 0.0
    %112 = vmatpush1.msra.mxu0 0.0
    %113 = vmatprep.subr.mxu0 0.0
    %114 = vmatpush1.msra.mxu0 0.0
    %115 = vmatprep.subr.mxu0 0.0
    %116 = vmatpush1.msra.mxu0 0.0
    %117 = vmatprep.subr.mxu0 0.0
    %118 = vmatpush1.msra.mxu0 0.0
    %119 = vmatprep.mubr.f32.mxu0 0.0
    %120 = vmatmul.mubr.f32.gmra.mrb[0].mxu0 %v38
    %v121 = vpop.f32.mrb[0].mxu0
    %v122 = vadd.f32 0.0, %v121
    %v123 = vpop.f32.mrb[0].mxu0
    %124 = vdwg.mxu0
    %125 = vst [vmem:[#allocation7] sm:$0xff] %v122
    // Predicated region
    $region18: #{tpu_custom_call.1} parent=1 // pred_check
      _
    $region19: #{tpu_custom_call.1} parent=1 // pred_check_branch
      %127 = sbr.rel (0) target = $region21
    $region20: #{tpu_custom_call.1} parent=1 // pred_region
      %s129 = ssub.s32 128, 128
      %130 = vsyncadd [#allocation4], %s129
      %s132 = sshll.u32 [#allocation7], 4
      %s133 = int_to_ptr.vmem [resolvable:$true] %s132
      %135 = dma.vmem_to_hbm [thread:$0]  %s133, 128, %s2, [#allocation4]
    $region21: #{tpu_custom_call.1} parent=1 // pred_fallthru
      _
    // Predicated region
    $region22: #{tpu_custom_call.1} parent=1 // pred_check
      _
    $region23: #{tpu_custom_call.1} parent=1 // pred_check_branch
      %137 = sbr.rel (0) target = $region25
    $region24: #{tpu_custom_call.1} parent=1 // pred_region
      %138 = dma.done [#allocation4], 128
    $region25: #{tpu_custom_call.1} parent=1 // pred_fallthru
      _
    %139 = vsyncpa [#allocation3], 1
    %140 = vsyncpa [#allocation6], 1
    %141 = vsyncpa [#allocation4], 1

</llo_original>
